<compile_context>
chip_gen: v5e
topology: v5e:2x2
jax: 0.10.0
libtpu: 0.0.40
codegen_flags: <defaults>
</compile_context>

<pallas_src>
import jax
import jax.numpy as jnp
from jax.experimental import pallas as pl
from jax.experimental.pallas import tpu as pltpu

_LANES = 128
_N = 3
_S_MAX = 64  # (9, 64, 128) f32 block = 288 KiB per buffer


def _cholesky3x3_kernel(x_ref, o_ref):
    """Closed-form 3x3 Cholesky, elementwise over (S, 128) slabs per entry.

    x_ref / o_ref: (9, S, 128) f32.  Row k holds entry (k // 3, k % 3) of the
    row-major-flattened 3x3 matrix for each of the S*128 lanes in this block.
    Only the lower triangle of the (symmetric) input is read, matching
    torch.cholesky(upper=False).
    """
    a00 = x_ref[0]
    a10 = x_ref[3]
    a11 = x_ref[4]
    a20 = x_ref[6]
    a21 = x_ref[7]
    a22 = x_ref[8]

    # Column 0.
    inv0 = jax.lax.rsqrt(a00)                 # EUP
    l00 = a00 * inv0                          # == sqrt(a00)
    l10 = a10 * inv0
    l20 = a20 * inv0

    # Column 1.
    d1 = a11 - l10 * l10
    inv1 = jax.lax.rsqrt(d1)                  # EUP
    l11 = d1 * inv1
    l21 = (a21 - l20 * l10) * inv1

    # Column 2.
    d2 = a22 - l20 * l20 - l21 * l21
    l22 = d2 * jax.lax.rsqrt(d2)              # EUP

    # Direct row stores; lower-triangular result
    # [[l00, 0, 0], [l10, l11, 0], [l20, l21, l22]].
    z = jnp.zeros_like(l00)
    o_ref[0] = l00
    o_ref[1] = z
    o_ref[2] = z
    o_ref[3] = l10
    o_ref[4] = l11
    o_ref[5] = z
    o_ref[6] = l20
    o_ref[7] = l21
    o_ref[8] = l22


def _choose_tiling(nb):
    """Pick (nb_pad, s): sublane-group count padded so nb_pad % s == 0.

    s is a multiple of 8 (or equals the full extent when nb <= 8), capped at
    _S_MAX; prefers >= 2 grid steps so both v7x TensorCores get work.
    """
    if nb <= 8:
        return nb, nb                          # one full-extent block
    if nb > _S_MAX:
        s = _S_MAX
    else:
        s = 8 * ((nb + 15) // 16)              # ~half the batch, multiple of 8
        s = max(8, min(s, _S_MAX))
    nb_pad = -(-nb // s) * s
    return nb_pad, s


def cholesky_packed(xp):
    """Lower Cholesky factors in packed layout (kept end-to-end, no transposes).

    xp: (9, NB, 128) float32, xp[k, g, l] = entry (k // 3, k % 3) of matrix
        g * 128 + l.  Returns the same layout holding the lower factors.
    """
    nine, nb, lanes = xp.shape
    assert nine == _N * _N and lanes == _LANES, xp.shape

    nb_pad, s = _choose_tiling(nb)
    if nb_pad != nb:
        # Zero padding: padded lanes produce NaN (rsqrt(0)) but are purely
        # per-lane and sliced off below.
        xp = jnp.pad(xp, ((0, 0), (0, nb_pad - nb), (0, 0)))

    out = pl.pallas_call(
        _cholesky3x3_kernel,
        out_shape=jax.ShapeDtypeStruct((nine, nb_pad, lanes), xp.dtype),
        grid=(nb_pad // s,),
        in_specs=[pl.BlockSpec((nine, s, lanes), lambda i: (0, i, 0))],
        out_specs=pl.BlockSpec((nine, s, lanes), lambda i: (0, i, 0)),
        compiler_params=pltpu.CompilerParams(
            dimension_semantics=("parallel",)),
    )(xp)

    if nb_pad != nb:
        out = out[:, :nb, :]
    return out


def cholesky_batched(x):
    """Lower Cholesky factors of a batch of SPD matrices.

    x: (B, 3, 3) float32 SPD  ->  (B, 3, 3) lower-triangular factors.
    Adapter around `cholesky_packed`; does one layout permute + tail pad.
    """
    b = x.shape[0]
    assert x.shape == (b, _N, _N), x.shape

    b_pad = -(-b // _LANES) * _LANES
    if b_pad != b:
        x = jnp.pad(x, ((0, b_pad - b), (0, 0), (0, 0)))
    nb = b_pad // _LANES

    # (B, 3, 3) -> (9, NB, 128): batch on the lane axis, entries on rows.
    xp = x.reshape(nb, _LANES, _N * _N).transpose(2, 0, 1)
    op = cholesky_packed(xp)
    return op.transpose(1, 2, 0).reshape(b_pad, _N, _N)[:b]


def cholesky(x):
    """TestCholesky.forward: torch.cholesky(x) for a single (3, 3) SPD matrix."""
    assert x.shape == (_N, _N), x.shape
    return cholesky_batched(x[None])[0]


if __name__ == "__main__":
    # The exact matrix used in the PyTorch test script.
    x_single = jnp.array(
        [[2.3999, 2.2497, -1.7825],
         [2.2497, 3.1641, -3.4624],
         [-1.7825, -3.4624, 4.5418]],
        dtype=jnp.float32,
    )
    L = cholesky(x_single)
    jax.block_until_ready(L)
    ref = jnp.linalg.cholesky(x_single)
    assert jnp.allclose(L, ref, atol=1e-5, rtol=1e-5), (L, ref)

    # Batched path (throughput-oriented): 2048 SPD matrices -> NB = 16 sublane
    # groups, S = 8, grid = 2 parallel steps.
    key = jax.random.PRNGKey(0)
    m = jax.random.normal(key, (2048, _N, _N), dtype=jnp.float32)
    a = m @ jnp.swapaxes(m, -1, -2) + 3.0 * jnp.eye(_N, dtype=jnp.float32)
    Lb = cholesky_batched(a)
    jax.block_until_ready(Lb)
    refb = jnp.linalg.cholesky(a)
    assert jnp.allclose(Lb, refb, atol=1e-4, rtol=1e-4), (Lb, refb)

    # Ragged batch (B not a multiple of 128) exercises the pad/slice path.
    a_tail = a[:300]
    Lt = cholesky_batched(a_tail)
    jax.block_until_ready(Lt)
    assert jnp.allclose(Lt, refb[:300], atol=1e-4, rtol=1e-4)

    print("KERNEL_OK")
</pallas_src>

<mosaic_0001>
module attributes {stable_mosaic.version = 11 : i64} {
  func.func @_cholesky3x3_kernel(%arg0: i32, %arg1: memref<9x1x128xf32, #tpu.memory_space<vmem>>, %arg2: memref<9x1x128xf32, #tpu.memory_space<vmem>>) attributes {dimension_semantics = [#tpu.dimension_semantics<parallel>], iteration_bounds = array<i64: 1>, scalar_prefetch = 0 : i64, scratch_operands = 0 : i64, tpu.core_type = #tpu.core_type<tc>, window_params = [{transform_indices = @transform_0, window_bounds = array<i64: 9, 1, 128>}, {transform_indices = @transform_1, window_bounds = array<i64: 9, 1, 128>}]} {
    %c0 = arith.constant 0 : index
    %c0_0 = arith.constant 0 : index
    %c0_1 = arith.constant 0 : index
    %0 = vector.load %arg1[%c0, %c0_0, %c0_1] : memref<9x1x128xf32, #tpu.memory_space<vmem>>, vector<1x1x128xf32>
    %1 = vector.shape_cast %0 : vector<1x1x128xf32> to vector<1x128xf32>
    %c3 = arith.constant 3 : index
    %c0_2 = arith.constant 0 : index
    %c0_3 = arith.constant 0 : index
    %2 = vector.load %arg1[%c3, %c0_2, %c0_3] : memref<9x1x128xf32, #tpu.memory_space<vmem>>, vector<1x1x128xf32>
    %3 = vector.shape_cast %2 : vector<1x1x128xf32> to vector<1x128xf32>
    %c4 = arith.constant 4 : index
    %c0_4 = arith.constant 0 : index
    %c0_5 = arith.constant 0 : index
    %4 = vector.load %arg1[%c4, %c0_4, %c0_5] : memref<9x1x128xf32, #tpu.memory_space<vmem>>, vector<1x1x128xf32>
    %5 = vector.shape_cast %4 : vector<1x1x128xf32> to vector<1x128xf32>
    %c6 = arith.constant 6 : index
    %c0_6 = arith.constant 0 : index
    %c0_7 = arith.constant 0 : index
    %6 = vector.load %arg1[%c6, %c0_6, %c0_7] : memref<9x1x128xf32, #tpu.memory_space<vmem>>, vector<1x1x128xf32>
    %7 = vector.shape_cast %6 : vector<1x1x128xf32> to vector<1x128xf32>
    %c7 = arith.constant 7 : index
    %c0_8 = arith.constant 0 : index
    %c0_9 = arith.constant 0 : index
    %8 = vector.load %arg1[%c7, %c0_8, %c0_9] : memref<9x1x128xf32, #tpu.memory_space<vmem>>, vector<1x1x128xf32>
    %9 = vector.shape_cast %8 : vector<1x1x128xf32> to vector<1x128xf32>
    %c8 = arith.constant 8 : index
    %c0_10 = arith.constant 0 : index
    %c0_11 = arith.constant 0 : index
    %10 = vector.load %arg1[%c8, %c0_10, %c0_11] : memref<9x1x128xf32, #tpu.memory_space<vmem>>, vector<1x1x128xf32>
    %11 = vector.shape_cast %10 : vector<1x1x128xf32> to vector<1x128xf32>
    %12 = math.rsqrt %1 : vector<1x128xf32>
    %13 = arith.mulf %1, %12 : vector<1x128xf32>
    %14 = arith.mulf %3, %12 : vector<1x128xf32>
    %15 = arith.mulf %7, %12 : vector<1x128xf32>
    %16 = arith.mulf %14, %14 : vector<1x128xf32>
    %17 = arith.subf %5, %16 : vector<1x128xf32>
    %18 = math.rsqrt %17 : vector<1x128xf32>
    %19 = arith.mulf %17, %18 : vector<1x128xf32>
    %20 = arith.mulf %15, %14 : vector<1x128xf32>
    %21 = arith.subf %9, %20 : vector<1x128xf32>
    %22 = arith.mulf %21, %18 : vector<1x128xf32>
    %23 = arith.mulf %15, %15 : vector<1x128xf32>
    %24 = arith.subf %11, %23 : vector<1x128xf32>
    %25 = arith.mulf %22, %22 : vector<1x128xf32>
    %26 = arith.subf %24, %25 : vector<1x128xf32>
    %27 = math.rsqrt %26 : vector<1x128xf32>
    %28 = arith.mulf %26, %27 : vector<1x128xf32>
    %cst = arith.constant 0.000000e+00 : f32
    %29 = vector.broadcast %cst : f32 to vector<1x128xf32>
    %c0_12 = arith.constant 0 : index
    %c0_13 = arith.constant 0 : index
    %c0_14 = arith.constant 0 : index
    %30 = vector.load %arg2[%c0_12, %c0_13, %c0_14] : memref<9x1x128xf32, #tpu.memory_space<vmem>>, vector<1x1x128xf32>
    %31 = vector.shape_cast %30 : vector<1x1x128xf32> to vector<1x128xf32>
    %32 = vector.shape_cast %13 : vector<1x128xf32> to vector<1x1x128xf32>
    tpu.vector_store %arg2[%c0_12, %c0_13, %c0_14], %32 {strides = array<i32>} : memref<9x1x128xf32, #tpu.memory_space<vmem>>, vector<1x1x128xf32>,
    %c1 = arith.constant 1 : index
    %c0_15 = arith.constant 0 : index
    %c0_16 = arith.constant 0 : index
    %33 = vector.load %arg2[%c1, %c0_15, %c0_16] : memref<9x1x128xf32, #tpu.memory_space<vmem>>, vector<1x1x128xf32>
    %34 = vector.shape_cast %33 : vector<1x1x128xf32> to vector<1x128xf32>
    %35 = vector.shape_cast %29 : vector<1x128xf32> to vector<1x1x128xf32>
    tpu.vector_store %arg2[%c1, %c0_15, %c0_16], %35 {strides = array<i32>} : memref<9x1x128xf32, #tpu.memory_space<vmem>>, vector<1x1x128xf32>,
    %c2 = arith.constant 2 : index
    %c0_17 = arith.constant 0 : index
    %c0_18 = arith.constant 0 : index
    %36 = vector.load %arg2[%c2, %c0_17, %c0_18] : memref<9x1x128xf32, #tpu.memory_space<vmem>>, vector<1x1x128xf32>
    %37 = vector.shape_cast %36 : vector<1x1x128xf32> to vector<1x128xf32>
    %38 = vector.shape_cast %29 : vector<1x128xf32> to vector<1x1x128xf32>
    tpu.vector_store %arg2[%c2, %c0_17, %c0_18], %38 {strides = array<i32>} : memref<9x1x128xf32, #tpu.memory_space<vmem>>, vector<1x1x128xf32>,
    %c3_19 = arith.constant 3 : index
    %c0_20 = arith.constant 0 : index
    %c0_21 = arith.constant 0 : index
    %39 = vector.load %arg2[%c3_19, %c0_20, %c0_21] : memref<9x1x128xf32, #tpu.memory_space<vmem>>, vector<1x1x128xf32>
    %40 = vector.shape_cast %39 : vector<1x1x128xf32> to vector<1x128xf32>
    %41 = vector.shape_cast %14 : vector<1x128xf32> to vector<1x1x128xf32>
    tpu.vector_store %arg2[%c3_19, %c0_20, %c0_21], %41 {strides = array<i32>} : memref<9x1x128xf32, #tpu.memory_space<vmem>>, vector<1x1x128xf32>,
    %c4_22 = arith.constant 4 : index
    %c0_23 = arith.constant 0 : index
    %c0_24 = arith.constant 0 : index
    %42 = vector.load %arg2[%c4_22, %c0_23, %c0_24] : memref<9x1x128xf32, #tpu.memory_space<vmem>>, vector<1x1x128xf32>
    %43 = vector.shape_cast %42 : vector<1x1x128xf32> to vector<1x128xf32>
    %44 = vector.shape_cast %19 : vector<1x128xf32> to vector<1x1x128xf32>
    tpu.vector_store %arg2[%c4_22, %c0_23, %c0_24], %44 {strides = array<i32>} : memref<9x1x128xf32, #tpu.memory_space<vmem>>, vector<1x1x128xf32>,
    %c5 = arith.constant 5 : index
    %c0_25 = arith.constant 0 : index
    %c0_26 = arith.constant 0 : index
    %45 = vector.load %arg2[%c5, %c0_25, %c0_26] : memref<9x1x128xf32, #tpu.memory_space<vmem>>, vector<1x1x128xf32>
    %46 = vector.shape_cast %45 : vector<1x1x128xf32> to vector<1x128xf32>
    %47 = vector.shape_cast %29 : vector<1x128xf32> to vector<1x1x128xf32>
    tpu.vector_store %arg2[%c5, %c0_25, %c0_26], %47 {strides = array<i32>} : memref<9x1x128xf32, #tpu.memory_space<vmem>>, vector<1x1x128xf32>,
    %c6_27 = arith.constant 6 : index
    %c0_28 = arith.constant 0 : index
    %c0_29 = arith.constant 0 : index
    %48 = vector.load %arg2[%c6_27, %c0_28, %c0_29] : memref<9x1x128xf32, #tpu.memory_space<vmem>>, vector<1x1x128xf32>
    %49 = vector.shape_cast %48 : vector<1x1x128xf32> to vector<1x128xf32>
    %50 = vector.shape_cast %15 : vector<1x128xf32> to vector<1x1x128xf32>
    tpu.vector_store %arg2[%c6_27, %c0_28, %c0_29], %50 {strides = array<i32>} : memref<9x1x128xf32, #tpu.memory_space<vmem>>, vector<1x1x128xf32>,
    %c7_30 = arith.constant 7 : index
    %c0_31 = arith.constant 0 : index
    %c0_32 = arith.constant 0 : index
    %51 = vector.load %arg2[%c7_30, %c0_31, %c0_32] : memref<9x1x128xf32, #tpu.memory_space<vmem>>, vector<1x1x128xf32>
    %52 = vector.shape_cast %51 : vector<1x1x128xf32> to vector<1x128xf32>
    %53 = vector.shape_cast %22 : vector<1x128xf32> to vector<1x1x128xf32>
    tpu.vector_store %arg2[%c7_30, %c0_31, %c0_32], %53 {strides = array<i32>} : memref<9x1x128xf32, #tpu.memory_space<vmem>>, vector<1x1x128xf32>,
    %c8_33 = arith.constant 8 : index
    %c0_34 = arith.constant 0 : index
    %c0_35 = arith.constant 0 : index
    %54 = vector.load %arg2[%c8_33, %c0_34, %c0_35] : memref<9x1x128xf32, #tpu.memory_space<vmem>>, vector<1x1x128xf32>
    %55 = vector.shape_cast %54 : vector<1x1x128xf32> to vector<1x128xf32>
    %56 = vector.shape_cast %28 : vector<1x128xf32> to vector<1x1x128xf32>
    tpu.vector_store %arg2[%c8_33, %c0_34, %c0_35], %56 {strides = array<i32>} : memref<9x1x128xf32, #tpu.memory_space<vmem>>, vector<1x1x128xf32>,
    return
  }
  func.func @transform_0(%arg0: i32) -> (i32, i32, i32) {
    %c0_i32 = arith.constant 0 : i32
    %c0_i32_0 = arith.constant 0 : i32
    %c0_i32_1 = arith.constant 0 : i32
    return %c0_i32, %arg0, %c0_i32_0 : i32, i32, i32
  }
  func.func @transform_1(%arg0: i32) -> (i32, i32, i32) {
    %c0_i32 = arith.constant 0 : i32
    %c0_i32_0 = arith.constant 0 : i32
    %c0_i32_1 = arith.constant 0 : i32
    return %c0_i32, %arg0, %c0_i32_0 : i32, i32, i32
  }
}

</mosaic_0001>

<llo_original>
// kernel: tpu_custom_call.1
$region0: #{tpu_custom_call.1}
  #allocation0 [shape = 'u32[]', space=smem, size = 0x4, offset = 0x4, fixed_abs, tag = 'smem constant byte address 0x4 - core index']
  #allocation1 [shape = 'u32[72,128]{1,0:T(1,128)}', space=vmem, size = 0x9000, scoped, tag = 'internal scratch']
  %s0 = inlined_call_operand.hbm [shape: f32[9,1,128], index: 0, kind: input, shape index: {}]
  %s1 = inlined_call_operand.hbm [shape: f32[9,1,128], index: 1, kind: output, shape index: {}]
  %s2 = sld [smem:[#allocation0]]
  $region18: #{tpu_custom_call.1} parent=0
    _
  %s4 = ssub.s32 1, %s2
  %s5 = scalar_select 0, %s4, %s2
  $region1: #{tpu_custom_call.1} parent=0
    #allocation2 [shape = 'u8[4608]{0}', space=vmem, size = 0x1400, scoped, tag = 'input window, operand 0, single buffered']
    #allocation3 [shape = 's32[1]{0}', space=sflag, size = 0x4, scoped, tag = 'scoped memory for tpu_custom_call.1']
    #allocation4 [shape = 's32[1]{0}', space=sflag, size = 0x4, scoped, tag = 'scoped memory for tpu_custom_call.1']
    #allocation5 [shape = 'u8[4608]{0}', space=vmem, size = 0x1400, scoped, tag = 'output window, operand 0, single buffered']
    %6 = vsyncpa [#allocation3], 0
    %7 = vsyncpa [#allocation4], 0
    // Predicated region
    $region2: #{tpu_custom_call.1} parent=1 // pred_check
      _
    $region3: #{tpu_custom_call.1} parent=1 // pred_check_branch
      %9 = sbr.rel (0) target = $region5
    $region4: #{tpu_custom_call.1} parent=1 // pred_region
      %11 = vsyncadd [#allocation3], 0
      %s12 = sshll.u32 %s0, 4
      %s13 = int_to_ptr.hbm [resolvable:$true] %s12
      %s14 = sshll.u32 [#allocation2], 4
      %s15 = int_to_ptr.vmem [resolvable:$true] %s14
      %20 = dma.hbm_to_vmem [thread:$0]  %s13, 144, %s15, [#allocation3], 16, 16, 1
    $region5: #{tpu_custom_call.1} parent=1 // pred_fallthru
      _
    // Predicated region
    $region6: #{tpu_custom_call.1} parent=1 // pred_check
      _
    $region7: #{tpu_custom_call.1} parent=1 // pred_check_branch
      %22 = sbr.rel (0) target = $region9
    $region8: #{tpu_custom_call.1} parent=1 // pred_region
      %24 = dma.done [#allocation3], 144
    $region9: #{tpu_custom_call.1} parent=1 // pred_fallthru
      _
    %v25 = vld [vmem:[#allocation2] sm:$0x1]
    %s26 = scalar_lea.vmem [#allocation2], 3
    %v27 = vld [vmem:[%s26] sm:$0x1]
    %s28 = scalar_lea.vmem [#allocation2], 4
    %v29 = vld [vmem:[%s28] sm:$0x1]
    %s30 = scalar_lea.vmem [#allocation2], 6
    %v31 = vld [vmem:[%s30] sm:$0x1]
    %s32 = scalar_lea.vmem [#allocation2], 7
    %v33 = vld [vmem:[%s32] sm:$0x1]
    %s34 = scalar_lea.vmem [#allocation2], 8
    %v35 = vld [vmem:[%s34] sm:$0x1]
    %v36 = vrsqrt.pop %v25
    %v37 = vmul.f32 %v36, %v25
    %v38 = vmul.f32 %v37, %v36
    %v39 = vmul.f32 0.5, %v38
    %v40 = vsub.f32 1.5, %v39
    %v41 = vmul.f32 %v36, %v40
    %vm42 = vweird.f32 %v25
    %vm43 = vweird.f32 %v36
    %vm44 = vmor %vm42, %vm43
    %v45 = vsel %vm44, %v36, %v41
    %v46 = vmul.f32 %v25, %v45
    %v47 = vmul.f32 %v27, %v45
    %v48 = vmul.f32 %v31, %v45
    %v49 = vmul.f32 %v47, %v47
    %v50 = vsub.f32 %v29, %v49
    %v51 = vrsqrt.pop %v50
    %v52 = vmul.f32 %v51, %v50
    %v53 = vmul.f32 %v52, %v51
    %v54 = vmul.f32 0.5, %v53
    %v55 = vsub.f32 1.5, %v54
    %v56 = vmul.f32 %v51, %v55
    %vm57 = vweird.f32 %v50
    %vm58 = vweird.f32 %v51
    %vm59 = vmor %vm57, %vm58
    %v60 = vsel %vm59, %v51, %v56
    %v61 = vmul.f32 %v50, %v60
    %v62 = vmul.f32 %v48, %v47
    %v63 = vsub.f32 %v33, %v62
    %v64 = vmul.f32 %v63, %v60
    %v65 = vmul.f32 %v48, %v48
    %v66 = vsub.f32 %v35, %v65
    %v67 = vmul.f32 %v64, %v64
    %v68 = vsub.f32 %v66, %v67
    %v69 = vrsqrt.pop %v68
    %v70 = vmul.f32 %v69, %v68
    %v71 = vmul.f32 %v70, %v69
    %v72 = vmul.f32 0.5, %v71
    %v73 = vsub.f32 1.5, %v72
    %v74 = vmul.f32 %v69, %v73
    %vm75 = vweird.f32 %v68
    %vm76 = vweird.f32 %v69
    %vm77 = vmor %vm75, %vm76
    %v78 = vsel %vm77, %v69, %v74
    %v79 = vmul.f32 %v68, %v78
    %80 = vst [vmem:[#allocation5] sm:$0x1] %v46
    %s81 = scalar_lea.vmem [#allocation5], 1
    %82 = vst [vmem:[%s81] sm:$0x1] 0.0
    %s83 = scalar_lea.vmem [#allocation5], 2
    %84 = vst [vmem:[%s83] sm:$0x1] 0.0
    %s85 = scalar_lea.vmem [#allocation5], 3
    %86 = vst [vmem:[%s85] sm:$0x1] %v47
    %s87 = scalar_lea.vmem [#allocation5], 4
    %88 = vst [vmem:[%s87] sm:$0x1] %v61
    %s89 = scalar_lea.vmem [#allocation5], 5
    %90 = vst [vmem:[%s89] sm:$0x1] 0.0
    %s91 = scalar_lea.vmem [#allocation5], 6
    %92 = vst [vmem:[%s91] sm:$0x1] %v48
    %s93 = scalar_lea.vmem [#allocation5], 7
    %94 = vst [vmem:[%s93] sm:$0x1] %v64
    %s95 = scalar_lea.vmem [#allocation5], 8
    %96 = vst [vmem:[%s95] sm:$0x1] %v79
    // Predicated region
    $region10: #{tpu_custom_call.1} parent=1 // pred_check
      _
    $region11: #{tpu_custom_call.1} parent=1 // pred_check_branch
      %98 = sbr.rel (0) target = $region13
    $region12: #{tpu_custom_call.1} parent=1 // pred_region
      %100 = vsyncadd [#allocation4], 0
      %s101 = sshll.u32 [#allocation5], 4
      %s102 = int_to_ptr.vmem [resolvable:$true] %s101
      %s103 = sshll.u32 %s1, 4
      %s104 = int_to_ptr.hbm [resolvable:$true] %s103
      %109 = dma.vmem_to_hbm [thread:$0]  %s102, 144, %s104, [#allocation4], 16, 16, 1
    $region13: #{tpu_custom_call.1} parent=1 // pred_fallthru
      _
    // Predicated region
    $region14: #{tpu_custom_call.1} parent=1 // pred_check
      _
    $region15: #{tpu_custom_call.1} parent=1 // pred_check_branch
      %111 = sbr.rel (0) target = $region17
    $region16: #{tpu_custom_call.1} parent=1 // pred_region
      %113 = dma.done [#allocation4], 144
    $region17: #{tpu_custom_call.1} parent=1 // pred_fallthru
      _
    %114 = vsyncpa [#allocation3], 1
    %115 = vsyncpa [#allocation4], 1

</llo_original>
